<compile_context>
chip_gen: v5e
topology: v5e:2x2
jax: 0.10.0
libtpu: 0.0.40
codegen_flags: <defaults>
</compile_context>

<pallas_src>
import functools

import jax
import jax.numpy as jnp
from jax.experimental import pallas as pl
from jax.experimental.pallas import tpu as pltpu

LEAKY_SLOPE = 0.01   # nn.LeakyReLU default negative_slope
BN_EPS = 1e-5        # nn.BatchNorm2d default eps


def _conv_bn_lrelu_kernel(w_ref, shift_ref, x_ref, o_ref, *,
                          tap_offsets, p_pad, batch_tile):
    """One grid step = `batch_tile` batch elements.

    w_ref:     (K*K, Cout, Cin)           BN-scale-folded conv weights (tap-major)
    shift_ref: (Cout, 1) f32              folded conv-bias + BN shift
    x_ref:     (batch_tile, Cin, HW_ext)  raw input, H*W flattened + halo padding
    o_ref:     (batch_tile, Cout, p_pad)  all H*W output positions (lane padded)
    """
    cout = w_ref.shape[1]
    for b in range(batch_tile):                        # static, small
        x2 = x_ref[b]                                  # (Cin, HW_ext)
        acc = jnp.zeros((cout, p_pad), jnp.float32)
        for t, off in enumerate(tap_offsets):          # static K*K taps
            # Dilated tap (kh, kw) == the flattened plane shifted by kh*d*W + kw*d.
            # Static (possibly lane-unaligned) window read; no im2col buffer.
            xt = x2[:, off:off + p_pad]                # (Cin, p_pad)
            acc = acc + jnp.dot(w_ref[t], xt, preferred_element_type=jnp.float32)
        y = acc + shift_ref[...]                       # folded conv bias + BN shift (f32)
        y = jnp.maximum(y, LEAKY_SLOPE * y)            # LeakyReLU
        # Dropout2d is the identity in eval mode.
        o_ref[b] = y.astype(o_ref.dtype)


def causal_conv_block(x_nchw, w_oihw, bias, gamma, beta, running_mean, running_var,
                      *, kernel_size, dilation, batch_tile=1, mxu_dtype=None):
    """Eval-mode CausalConvBlock forward (Conv2d + BN2d + Dropout2d + LeakyReLU).

    batch_tile: batch elements per grid step (must divide N). Use 1..N//2 on v7x
                (keep >=2 parallel steps); N on single-TC v5e/v6e to collapse steps.
    mxu_dtype:  optional dtype (e.g. jnp.bfloat16) for the MXU operands (w, x) on
                v6e/v7x; fold math, shift add and accumulation stay in f32.
    """
    N, Cin, H, W = x_nchw.shape
    Cout = w_oihw.shape[0]
    K = kernel_size
    d = dilation
    OH = H - (K - 1) * d
    OW = W - (K - 1) * d
    assert OH > 0 and OW > 0
    assert N % batch_tile == 0
    out_dtype = x_nchw.dtype
    op_dtype = mxu_dtype if mxu_dtype is not None else x_nchw.dtype

    # The kernel computes all H*W positions (row-major over the input plane);
    # positions with oh >= OH or ow >= OW read into the next row / halo padding
    # and are sliced off below (waste ~= ((K-1)*d)/H, a few % at real H*W).
    HW = H * W
    p_pad = pl.cdiv(HW, 128) * 128                           # lane-dense output width
    tap_offsets = tuple(kh * d * W + kw * d for kh in range(K) for kw in range(K))
    max_off = tap_offsets[-1]
    hw_ext = pl.cdiv(p_pad + max_off, 128) * 128             # halo keeps every window in-bounds

    # ---- Fold BatchNorm (running stats) + conv bias into weights / one shift (f32) ----
    scale = gamma * jax.lax.rsqrt(running_var + BN_EPS)                       # (Cout,)
    w_fold = (jnp.transpose(w_oihw, (2, 3, 0, 1)).reshape(K * K, Cout, Cin)
              * scale[None, :, None]).astype(op_dtype)                        # (K*K, Cout, Cin)
    shift = (beta + (bias - running_mean) * scale).reshape(Cout, 1).astype(jnp.float32)

    # ---- Input prep: pure reshape + halo zero-pad (one cheap pass, no replication) ----
    # TODO(synk): for planes where a whole (Cin, H*W) slab exceeds VMEM, tile the
    # position axis with a (K-1)*d*W halo instead of taking the full plane per step.
    x_rows = x_nchw.reshape(N, Cin, HW).astype(op_dtype)
    x_rows = jnp.pad(x_rows, ((0, 0), (0, 0), (0, hw_ext - HW)))

    num_steps = N // batch_tile
    kernel = functools.partial(_conv_bn_lrelu_kernel, tap_offsets=tap_offsets,
                               p_pad=p_pad, batch_tile=batch_tile)

    in_bytes = jnp.dtype(op_dtype).itemsize
    out_bytes = jnp.dtype(out_dtype).itemsize
    vmem_est = (2 * batch_tile * (Cin * hw_ext * in_bytes + Cout * p_pad * out_bytes)
                + 2 * (K * K * Cout * Cin * in_bytes + Cout * 4))
    cparams = dict(dimension_semantics=("parallel",))
    if vmem_est > 30 * 1024 * 1024:
        cparams["vmem_limit_bytes"] = min(int(vmem_est) + (8 << 20), 100 << 20)

    cost = pl.CostEstimate(
        flops=2 * N * Cout * K * K * Cin * p_pad,
        transcendentals=0,
        bytes_accessed=(N * Cin * hw_ext * in_bytes
                        + N * Cout * p_pad * out_bytes
                        + K * K * Cout * Cin * in_bytes),
    )

    out_flat = pl.pallas_call(
        kernel,
        out_shape=jax.ShapeDtypeStruct((N, Cout, p_pad), out_dtype),
        grid=(num_steps,),
        in_specs=[
            pl.BlockSpec((K * K, Cout, Cin), lambda n: (0, 0, 0)),         # folded weights
            pl.BlockSpec((Cout, 1), lambda n: (0, 0)),                     # folded shift
            pl.BlockSpec((batch_tile, Cin, hw_ext), lambda n: (n, 0, 0)),  # raw input rows
        ],
        out_specs=pl.BlockSpec((batch_tile, Cout, p_pad), lambda n: (n, 0, 0)),
        compiler_params=pltpu.CompilerParams(**cparams),
        cost_estimate=cost,
    )(w_fold, shift, x_rows)

    # Valid positions are oh < OH, ow < OW; output is already NCHW (no transpose).
    out = out_flat[:, :, :HW].reshape(N, Cout, H, W)[:, :, :OH, :OW]
    return out


def _reference(x, w, b, gamma, beta, mean, var, dilation):
    """Pure-JAX reference matching the eval-mode PyTorch module."""
    y = jax.lax.conv_general_dilated(
        x, w, window_strides=(1, 1), padding="VALID",
        rhs_dilation=(dilation, dilation),
        dimension_numbers=("NCHW", "OIHW", "NCHW"))
    y = y + b[None, :, None, None]
    scale = gamma / jnp.sqrt(var + BN_EPS)
    shift = beta - mean * scale
    y = y * scale[None, :, None, None] + shift[None, :, None, None]
    return jnp.where(y >= 0, y, LEAKY_SLOPE * y)


if __name__ == "__main__":
    # CausalConvBlock(in_channels=4, out_channels=8, kernel_size=3, dilation=2,
    #                 dropout=0.25, use_2d=True), eval mode.
    N, Cin, Cout, H, W = 2, 4, 8, 16, 16
    K, DIL = 3, 2

    key = jax.random.PRNGKey(0)
    ks = jax.random.split(key, 7)
    x = jax.random.normal(ks[0], (N, Cin, H, W), jnp.float32)
    w = 0.1 * jax.random.normal(ks[1], (Cout, Cin, K, K), jnp.float32)   # OIHW
    b = 0.1 * jax.random.normal(ks[2], (Cout,), jnp.float32)
    gamma = 1.0 + 0.1 * jax.random.normal(ks[3], (Cout,), jnp.float32)
    beta = 0.1 * jax.random.normal(ks[4], (Cout,), jnp.float32)
    running_mean = 0.1 * jax.random.normal(ks[5], (Cout,), jnp.float32)
    running_var = jnp.abs(jax.random.normal(ks[6], (Cout,), jnp.float32)) + 0.5

    out = causal_conv_block(x, w, b, gamma, beta, running_mean, running_var,
                            kernel_size=K, dilation=DIL)
    out = jax.block_until_ready(out)

    ref = _reference(x, w, b, gamma, beta, running_mean, running_var, DIL)
    OH, OW = H - (K - 1) * DIL, W - (K - 1) * DIL
    assert out.shape == (N, Cout, OH, OW), out.shape
    max_err = float(jnp.max(jnp.abs(out - ref)))
    assert jnp.allclose(out, ref, atol=1e-4, rtol=1e-4), f"max err {max_err}"

    print("KERNEL_OK")
</pallas_src>

<mosaic_0001>
module attributes {stable_mosaic.version = 11 : i64} {
  func.func @_conv_bn_lrelu_kernel(%arg0: i32, %arg1: memref<9x8x4xf32, #tpu.memory_space<vmem>>, %arg2: memref<8x1xf32, #tpu.memory_space<vmem>>, %arg3: memref<1x4x384xf32, #tpu.memory_space<vmem>>, %arg4: memref<1x8x256xf32, #tpu.memory_space<vmem>>) attributes {dimension_semantics = [#tpu.dimension_semantics<parallel>], iteration_bounds = array<i64: 2>, scalar_prefetch = 0 : i64, scratch_operands = 0 : i64, tpu.core_type = #tpu.core_type<tc>, window_params = [{pipeline_mode = #tpu.pipeline_mode<synchronous>, transform_indices = @transform_0, window_bounds = array<i64: 9, 8, 4>}, {pipeline_mode = #tpu.pipeline_mode<synchronous>, transform_indices = @transform_1, window_bounds = array<i64: 8, 1>}, {transform_indices = @transform_2, window_bounds = array<i64: 1, 4, 384>}, {transform_indices = @transform_3, window_bounds = array<i64: 1, 8, 256>}]} {
    %c0 = arith.constant 0 : index
    %c0_0 = arith.constant 0 : index
    %c0_1 = arith.constant 0 : index
    %0 = vector.load %arg3[%c0, %c0_0, %c0_1] : memref<1x4x384xf32, #tpu.memory_space<vmem>>, vector<1x4x384xf32>
    %1 = vector.shape_cast %0 : vector<1x4x384xf32> to vector<4x384xf32>
    %cst = arith.constant 0.000000e+00 : f32
    %2 = vector.broadcast %cst : f32 to vector<8x256xf32>
    %3 = vector.extract_strided_slice %1 {offsets = [0, 0], sizes = [4, 256], strides = [1, 1]} : vector<4x384xf32> to vector<4x256xf32>
    %c0_2 = arith.constant 0 : index
    %c0_3 = arith.constant 0 : index
    %c0_4 = arith.constant 0 : index
    %4 = vector.load %arg1[%c0_2, %c0_3, %c0_4] : memref<9x8x4xf32, #tpu.memory_space<vmem>>, vector<1x8x4xf32>
    %5 = vector.shape_cast %4 : vector<1x8x4xf32> to vector<8x4xf32>
    %cst_5 = arith.constant dense<0.000000e+00> : vector<8x256xf32>
    %6 = tpu.matmul %5, %3, %cst_5 {dimension_numbers = #tpu.dot_dimension_numbers<[1], [0], [0], [1], [0, 0, 1, 1], [], []>} : vector<8x4xf32>, vector<4x256xf32>, vector<8x256xf32> -> vector<8x256xf32>
    %7 = arith.addf %2, %6 : vector<8x256xf32>
    %8 = vector.extract_strided_slice %1 {offsets = [0, 2], sizes = [4, 256], strides = [1, 1]} : vector<4x384xf32> to vector<4x256xf32>
    %c1 = arith.constant 1 : index
    %c0_6 = arith.constant 0 : index
    %c0_7 = arith.constant 0 : index
    %9 = vector.load %arg1[%c1, %c0_6, %c0_7] : memref<9x8x4xf32, #tpu.memory_space<vmem>>, vector<1x8x4xf32>
    %10 = vector.shape_cast %9 : vector<1x8x4xf32> to vector<8x4xf32>
    %cst_8 = arith.constant dense<0.000000e+00> : vector<8x256xf32>
    %11 = tpu.matmul %10, %8, %cst_8 {dimension_numbers = #tpu.dot_dimension_numbers<[1], [0], [0], [1], [0, 0, 1, 1], [], []>} : vector<8x4xf32>, vector<4x256xf32>, vector<8x256xf32> -> vector<8x256xf32>
    %12 = arith.addf %7, %11 : vector<8x256xf32>
    %13 = vector.extract_strided_slice %1 {offsets = [0, 4], sizes = [4, 256], strides = [1, 1]} : vector<4x384xf32> to vector<4x256xf32>
    %c2 = arith.constant 2 : index
    %c0_9 = arith.constant 0 : index
    %c0_10 = arith.constant 0 : index
    %14 = vector.load %arg1[%c2, %c0_9, %c0_10] : memref<9x8x4xf32, #tpu.memory_space<vmem>>, vector<1x8x4xf32>
    %15 = vector.shape_cast %14 : vector<1x8x4xf32> to vector<8x4xf32>
    %cst_11 = arith.constant dense<0.000000e+00> : vector<8x256xf32>
    %16 = tpu.matmul %15, %13, %cst_11 {dimension_numbers = #tpu.dot_dimension_numbers<[1], [0], [0], [1], [0, 0, 1, 1], [], []>} : vector<8x4xf32>, vector<4x256xf32>, vector<8x256xf32> -> vector<8x256xf32>
    %17 = arith.addf %12, %16 : vector<8x256xf32>
    %18 = vector.extract_strided_slice %1 {offsets = [0, 32], sizes = [4, 256], strides = [1, 1]} : vector<4x384xf32> to vector<4x256xf32>
    %c3 = arith.constant 3 : index
    %c0_12 = arith.constant 0 : index
    %c0_13 = arith.constant 0 : index
    %19 = vector.load %arg1[%c3, %c0_12, %c0_13] : memref<9x8x4xf32, #tpu.memory_space<vmem>>, vector<1x8x4xf32>
    %20 = vector.shape_cast %19 : vector<1x8x4xf32> to vector<8x4xf32>
    %cst_14 = arith.constant dense<0.000000e+00> : vector<8x256xf32>
    %21 = tpu.matmul %20, %18, %cst_14 {dimension_numbers = #tpu.dot_dimension_numbers<[1], [0], [0], [1], [0, 0, 1, 1], [], []>} : vector<8x4xf32>, vector<4x256xf32>, vector<8x256xf32> -> vector<8x256xf32>
    %22 = arith.addf %17, %21 : vector<8x256xf32>
    %23 = vector.extract_strided_slice %1 {offsets = [0, 34], sizes = [4, 256], strides = [1, 1]} : vector<4x384xf32> to vector<4x256xf32>
    %c4 = arith.constant 4 : index
    %c0_15 = arith.constant 0 : index
    %c0_16 = arith.constant 0 : index
    %24 = vector.load %arg1[%c4, %c0_15, %c0_16] : memref<9x8x4xf32, #tpu.memory_space<vmem>>, vector<1x8x4xf32>
    %25 = vector.shape_cast %24 : vector<1x8x4xf32> to vector<8x4xf32>
    %cst_17 = arith.constant dense<0.000000e+00> : vector<8x256xf32>
    %26 = tpu.matmul %25, %23, %cst_17 {dimension_numbers = #tpu.dot_dimension_numbers<[1], [0], [0], [1], [0, 0, 1, 1], [], []>} : vector<8x4xf32>, vector<4x256xf32>, vector<8x256xf32> -> vector<8x256xf32>
    %27 = arith.addf %22, %26 : vector<8x256xf32>
    %28 = vector.extract_strided_slice %1 {offsets = [0, 36], sizes = [4, 256], strides = [1, 1]} : vector<4x384xf32> to vector<4x256xf32>
    %c5 = arith.constant 5 : index
    %c0_18 = arith.constant 0 : index
    %c0_19 = arith.constant 0 : index
    %29 = vector.load %arg1[%c5, %c0_18, %c0_19] : memref<9x8x4xf32, #tpu.memory_space<vmem>>, vector<1x8x4xf32>
    %30 = vector.shape_cast %29 : vector<1x8x4xf32> to vector<8x4xf32>
    %cst_20 = arith.constant dense<0.000000e+00> : vector<8x256xf32>
    %31 = tpu.matmul %30, %28, %cst_20 {dimension_numbers = #tpu.dot_dimension_numbers<[1], [0], [0], [1], [0, 0, 1, 1], [], []>} : vector<8x4xf32>, vector<4x256xf32>, vector<8x256xf32> -> vector<8x256xf32>
    %32 = arith.addf %27, %31 : vector<8x256xf32>
    %33 = vector.extract_strided_slice %1 {offsets = [0, 64], sizes = [4, 256], strides = [1, 1]} : vector<4x384xf32> to vector<4x256xf32>
    %c6 = arith.constant 6 : index
    %c0_21 = arith.constant 0 : index
    %c0_22 = arith.constant 0 : index
    %34 = vector.load %arg1[%c6, %c0_21, %c0_22] : memref<9x8x4xf32, #tpu.memory_space<vmem>>, vector<1x8x4xf32>
    %35 = vector.shape_cast %34 : vector<1x8x4xf32> to vector<8x4xf32>
    %cst_23 = arith.constant dense<0.000000e+00> : vector<8x256xf32>
    %36 = tpu.matmul %35, %33, %cst_23 {dimension_numbers = #tpu.dot_dimension_numbers<[1], [0], [0], [1], [0, 0, 1, 1], [], []>} : vector<8x4xf32>, vector<4x256xf32>, vector<8x256xf32> -> vector<8x256xf32>
    %37 = arith.addf %32, %36 : vector<8x256xf32>
    %38 = vector.extract_strided_slice %1 {offsets = [0, 66], sizes = [4, 256], strides = [1, 1]} : vector<4x384xf32> to vector<4x256xf32>
    %c7 = arith.constant 7 : index
    %c0_24 = arith.constant 0 : index
    %c0_25 = arith.constant 0 : index
    %39 = vector.load %arg1[%c7, %c0_24, %c0_25] : memref<9x8x4xf32, #tpu.memory_space<vmem>>, vector<1x8x4xf32>
    %40 = vector.shape_cast %39 : vector<1x8x4xf32> to vector<8x4xf32>
    %cst_26 = arith.constant dense<0.000000e+00> : vector<8x256xf32>
    %41 = tpu.matmul %40, %38, %cst_26 {dimension_numbers = #tpu.dot_dimension_numbers<[1], [0], [0], [1], [0, 0, 1, 1], [], []>} : vector<8x4xf32>, vector<4x256xf32>, vector<8x256xf32> -> vector<8x256xf32>
    %42 = arith.addf %37, %41 : vector<8x256xf32>
    %43 = vector.extract_strided_slice %1 {offsets = [0, 68], sizes = [4, 256], strides = [1, 1]} : vector<4x384xf32> to vector<4x256xf32>
    %c8 = arith.constant 8 : index
    %c0_27 = arith.constant 0 : index
    %c0_28 = arith.constant 0 : index
    %44 = vector.load %arg1[%c8, %c0_27, %c0_28] : memref<9x8x4xf32, #tpu.memory_space<vmem>>, vector<1x8x4xf32>
    %45 = vector.shape_cast %44 : vector<1x8x4xf32> to vector<8x4xf32>
    %cst_29 = arith.constant dense<0.000000e+00> : vector<8x256xf32>
    %46 = tpu.matmul %45, %43, %cst_29 {dimension_numbers = #tpu.dot_dimension_numbers<[1], [0], [0], [1], [0, 0, 1, 1], [], []>} : vector<8x4xf32>, vector<4x256xf32>, vector<8x256xf32> -> vector<8x256xf32>
    %47 = arith.addf %42, %46 : vector<8x256xf32>
    %c0_30 = arith.constant 0 : index
    %c0_31 = arith.constant 0 : index
    %48 = vector.load %arg2[%c0_30, %c0_31] : memref<8x1xf32, #tpu.memory_space<vmem>>, vector<8x1xf32>
    %49 = vector.broadcast %48 : vector<8x1xf32> to vector<8x256xf32>
    %50 = arith.addf %47, %49 : vector<8x256xf32>
    %cst_32 = arith.constant 0.00999999977 : f32
    %51 = vector.broadcast %cst_32 : f32 to vector<8x256xf32>
    %52 = arith.mulf %51, %50 : vector<8x256xf32>
    %53 = arith.maximumf %50, %52 : vector<8x256xf32>
    %c0_33 = arith.constant 0 : index
    %c0_34 = arith.constant 0 : index
    %c0_35 = arith.constant 0 : index
    %54 = vector.load %arg4[%c0_33, %c0_34, %c0_35] : memref<1x8x256xf32, #tpu.memory_space<vmem>>, vector<1x8x256xf32>
    %55 = vector.shape_cast %54 : vector<1x8x256xf32> to vector<8x256xf32>
    %56 = vector.shape_cast %53 : vector<8x256xf32> to vector<1x8x256xf32>
    tpu.vector_store %arg4[%c0_33, %c0_34, %c0_35], %56 {strides = array<i32>} : memref<1x8x256xf32, #tpu.memory_space<vmem>>, vector<1x8x256xf32>,
    return
  }
  func.func @transform_0(%arg0: i32) -> (i32, i32, i32) {
    %c0_i32 = arith.constant 0 : i32
    %c0_i32_0 = arith.constant 0 : i32
    %c0_i32_1 = arith.constant 0 : i32
    %c0_i32_2 = arith.constant 0 : i32
    return %c0_i32, %c0_i32_0, %c0_i32_1 : i32, i32, i32
  }
  func.func @transform_1(%arg0: i32) -> (i32, i32) {
    %c0_i32 = arith.constant 0 : i32
    %c0_i32_0 = arith.constant 0 : i32
    %c0_i32_1 = arith.constant 0 : i32
    return %c0_i32, %c0_i32_0 : i32, i32
  }
  func.func @transform_2(%arg0: i32) -> (i32, i32, i32) {
    %c0_i32 = arith.constant 0 : i32
    %c0_i32_0 = arith.constant 0 : i32
    %c0_i32_1 = arith.constant 0 : i32
    return %arg0, %c0_i32, %c0_i32_0 : i32, i32, i32
  }
  func.func @transform_3(%arg0: i32) -> (i32, i32, i32) {
    %c0_i32 = arith.constant 0 : i32
    %c0_i32_0 = arith.constant 0 : i32
    %c0_i32_1 = arith.constant 0 : i32
    return %arg0, %c0_i32, %c0_i32_0 : i32, i32, i32
  }
}

</mosaic_0001>

<llo_original>
// kernel: tpu_custom_call.1
$region0: #{tpu_custom_call.1}
  #allocation0 [shape = 'u32[]', space=smem, size = 0x4, offset = 0x4, fixed_abs, tag = 'smem constant byte address 0x4 - core index']
  #allocation1 [shape = 'u32[72,128]{1,0:T(1,128)}', space=vmem, size = 0x9000, scoped, tag = 'internal scratch']
  %s0 = inlined_call_operand.vmem [shape: f32[9,8,4], index: 0, kind: input, shape index: {}]
  %s1 = inlined_call_operand.vmem [shape: f32[8,1], index: 1, kind: input, shape index: {}]
  %s2 = inlined_call_operand.vmem [shape: f32[2,4,384], index: 2, kind: input, shape index: {}]
  %s3 = inlined_call_operand.hbm [shape: f32[2,8,256], index: 3, kind: output, shape index: {}]
  %s4 = sld [smem:[#allocation0]]
  $region45: #{tpu_custom_call.1} parent=0
    _
  %s6 = ssub.s32 1, %s4
  %s7 = scalar_select 0, %s6, %s4
  $region1: #{tpu_custom_call.1} parent=0
    #allocation2 [shape = 'u8[16384]{0}', space=vmem, size = 0x4000, scoped, tag = 'output window, operand 0']
    #allocation3 [shape = 's32[2]{0}', space=sflag, size = 0x8, scoped, tag = 'scoped memory for tpu_custom_call.1']
    %8 = vsyncpa [#allocation3], 0
    %s9 = scalar_lea.sflag [#allocation3], 1
    %10 = vsyncpa %s9, 0
    loop: start=0, step=1, limit=4
    $region2: #{tpu_custom_call.1} parent=1 // loop_pre_header
      _
    $region3: #{tpu_custom_call.1} parent=1 // loop_header
      %s12 = sphi 0, %s16
      %p13 = scmp.ge.s32.totalorder %s12, 4
      %s20 = sphi 0, %s20
      %s22 = sphi 0, %s20
      %s23 = sphi 0, %s22
      %s37 = sphi 0, %s23
      %s41 = sphi 0, %s41
      %s43 = sphi 0, %s41
      %s44 = sphi 0, %s43
      %s58 = sphi 0, %s44
      %s64 = sphi 0, %s66
      %s67 = sphi 0, %s64
      %s68 = sphi 0, %s67
      %s84 = sphi 0, %s68
      %s90 = sphi 0, %s92
      %s93 = sphi 0, %s90
      %s94 = sphi 0, %s93
      %s110 = sphi 0, %s94
    $region4: #{tpu_custom_call.1} parent=1 // loop_header_branch
      %15 = sbr.rel (%p13) target = $region8
    $region5: #{tpu_custom_call.1} parent=1 // loop_body
      %s17 = ssub.s32 %s12, 1
      %s18 = ssub.s32 %s12, 2
      %s19 = sadd.s32 %s12, 1
      %s21 = sadd.s32 %s20, 1
      %p24 = scmp.eq.s32.totalorder %s12, 1
      %p25 = scmp.ne.s32.totalorder %s20, %s22
      %p26 = scmp.eq.s32.totalorder %s12, 0
      %p27 = por %p25, %p26
      %p28 = scmp.ne.s32.totalorder %s20, %s22
      %p29 = scmp.eq.s32.totalorder %s17, 1
      %p30 = por %p28, %p29
      %p31 = scmp.ne.s32.totalorder %s22, %s23
      %p32 = scmp.eq.s32.totalorder %s17, 0
      %p33 = por %p31, %p32
      %p34 = scmp.ne.s32.totalorder %s22, %s23
      %p35 = scmp.eq.s32.totalorder %s18, 1
      %p36 = por %p34, %p35
      %p38 = scmp.ne.s32.totalorder %s23, %s37
      %p39 = scmp.eq.s32.totalorder %s18, 0
      %p40 = por %p38, %p39
      %s42 = sadd.s32 %s41, 1
      %p45 = scmp.eq.s32.totalorder %s12, 1
      %p46 = scmp.ne.s32.totalorder %s41, %s43
      %p47 = scmp.eq.s32.totalorder %s12, 0
      %p48 = por %p46, %p47
      %p49 = scmp.ne.s32.totalorder %s41, %s43
      %p50 = scmp.eq.s32.totalorder %s17, 1
      %p51 = por %p49, %p50
      %p52 = scmp.ne.s32.totalorder %s43, %s44
      %p53 = scmp.eq.s32.totalorder %s17, 0
      %p54 = por %p52, %p53
      %p55 = scmp.ne.s32.totalorder %s43, %s44
      %p56 = scmp.eq.s32.totalorder %s18, 1
      %p57 = por %p55, %p56
      %p59 = scmp.ne.s32.totalorder %s44, %s58
      %p60 = scmp.eq.s32.totalorder %s18, 0
      %p61 = por %p59, %p60
      %s62 = ssub.s32 %s12, %s19
      %p63 = scmp.eq.s32.totalorder %s62, 0
      %s65 = sadd.s32 %s64, 1
      %s66 = scalar_select %p63, %s64, %s65
      %p69 = pneg %p63
      %p70 = scmp.eq.s32.totalorder %s12, 1
      %p71 = por %p69, %p70
      %p72 = scmp.ne.s32.totalorder %s64, %s67
      %p73 = scmp.eq.s32.totalorder %s12, 0
      %p74 = por %p72, %p73
      %p75 = scmp.ne.s32.totalorder %s64, %s67
      %p76 = scmp.eq.s32.totalorder %s17, 1
      %p77 = por %p75, %p76
      %p78 = scmp.ne.s32.totalorder %s67, %s68
      %p79 = scmp.eq.s32.totalorder %s17, 0
      %p80 = por %p78, %p79
      %p81 = scmp.ne.s32.totalorder %s67, %s68
      %p82 = scmp.eq.s32.totalorder %s18, 1
      %p83 = por %p81, %p82
      %p85 = scmp.ne.s32.totalorder %s68, %s84
      %p86 = scmp.eq.s32.totalorder %s18, 0
      %p87 = por %p85, %p86
      %s88 = ssub.s32 %s12, %s19
      %p89 = scmp.eq.s32.totalorder %s88, 0
      %s91 = sadd.s32 %s90, 1
      %s92 = scalar_select %p89, %s90, %s91
      %p95 = pneg %p89
      %p96 = scmp.eq.s32.totalorder %s12, 1
      %p97 = por %p95, %p96
      %p98 = scmp.ne.s32.totalorder %s90, %s93
      %p99 = scmp.eq.s32.totalorder %s12, 0
      %p100 = por %p98, %p99
      %p101 = scmp.ne.s32.totalorder %s90, %s93
      %p102 = scmp.eq.s32.totalorder %s17, 1
      %p103 = por %p101, %p102
      %p104 = scmp.ne.s32.totalorder %s93, %s94
      %p105 = scmp.eq.s32.totalorder %s17, 0
      %p106 = por %p104, %p105
      %p107 = scmp.ne.s32.totalorder %s93, %s94
      %p108 = scmp.eq.s32.totalorder %s18, 1
      %p109 = por %p107, %p108
      %p111 = scmp.ne.s32.totalorder %s94, %s110
      %p112 = scmp.eq.s32.totalorder %s18, 0
      %p113 = por %p111, %p112
      %p114 = scmp.le.s32.totalorder 1, %s12
      %p115 = scmp.lt.s32.totalorder %s12, 3
      %p116 = pnand %p114, %p115
      %p117 = pneg %p116
      // Predicated region
      $region9: #{tpu_custom_call.1} parent=5 // pred_check
        _
      $region10: #{tpu_custom_call.1} parent=5 // pred_check_branch
        %119 = sbr.rel (%p116) target = $region12
      $region11: #{tpu_custom_call.1} parent=5 // pred_region
        %s120 = ssub.s32 %s12, 1
        // Predicated region
        $region13: #{tpu_custom_call.1} parent=11 // pred_check
          %p121 = pneg %p33
        $region14: #{tpu_custom_call.1} parent=11 // pred_check_branch
          %123 = sbr.rel (%p121) target = $region16
        $region15: #{tpu_custom_call.1} parent=11 // pred_region
          _
        $region16: #{tpu_custom_call.1} parent=11 // pred_fallthru
          _
        // Predicated region
        $region17: #{tpu_custom_call.1} parent=11 // pred_check
          %p124 = pneg %p54
        $region18: #{tpu_custom_call.1} parent=11 // pred_check_branch
          %126 = sbr.rel (%p124) target = $region20
        $region19: #{tpu_custom_call.1} parent=11 // pred_region
          _
        $region20: #{tpu_custom_call.1} parent=11 // pred_fallthru
          _
      $region12: #{tpu_custom_call.1} parent=5 // pred_fallthru
        _
      %p127 = scmp.lt.s32.totalorder %s12, 2
      // Predicated region
      $region21: #{tpu_custom_call.1} parent=5 // pred_check
        %p128 = pneg %p127
      $region22: #{tpu_custom_call.1} parent=5 // pred_check_branch
        %130 = sbr.rel (%p128) target = $region24
      $region23: #{tpu_custom_call.1} parent=5 // pred_region
        // Predicated region
        $region25: #{tpu_custom_call.1} parent=23 // pred_check
          %p131 = pneg %p74
        $region26: #{tpu_custom_call.1} parent=23 // pred_check_branch
          %133 = sbr.rel (%p131) target = $region28
        $region27: #{tpu_custom_call.1} parent=23 // pred_region
          %p134 = scmp.lt.s32.totalorder %s12, 1
          %s135 = scalar_select %p134, %s12, 1
          %s136 = smul.addr %s135, 3
          %s137 = smul.addr %s136, 4
          %s138 = scalar_lea.vmem %s2, %s137
        $region28: #{tpu_custom_call.1} parent=23 // pred_fallthru
          _
      $region24: #{tpu_custom_call.1} parent=5 // pred_fallthru
        _
      %p139 = scmp.le.s32.totalorder 1, %s12
      %p140 = scmp.lt.s32.totalorder %s12, 3
      %p141 = pnand %p139, %p140
      %p142 = pneg %p141
      // Predicated region
      $region29: #{tpu_custom_call.1} parent=5 // pred_check
        _
      $region30: #{tpu_custom_call.1} parent=5 // pred_check_branch
        %144 = sbr.rel (%p141) target = $region32
      $region31: #{tpu_custom_call.1} parent=5 // pred_region
        %s145 = ssub.s32 %s12, 1
        %p146 = pneg %p33
        %p147 = pneg %p30
        %p148 = pneg %p54
        %p149 = pneg %p51
        %p150 = scmp.lt.s32.totalorder %s17, 1
        %s151 = scalar_select %p150, %s17, 1
        %s152 = smul.addr %s151, 3
        %s153 = smul.addr %s152, 4
        %s154 = scalar_lea.vmem %s2, %s153
        %p155 = pneg %p80
        %p156 = pneg %p77
        %p157 = pneg %p106
        %p158 = pneg %p103
        %s159 = sand.u32 %s93, 1
        %s160 = scalar_lea.sflag [#allocation3], %s159
        %s161 = sand.u32 %s93, 1
        %s162 = smul.addr %s161, 16
        %s163 = scalar_lea.vmem [#allocation2], %s162
        %p164 = scmp.lt.s32.totalorder %s17, 1
        %s165 = scalar_select %p164, %s17, 1
        %s166 = smul.addr %s165, 3
        %s167 = smul.addr %s166, 4
        %s168 = scalar_lea.vmem %s2, %s167
        %v169 = vld [vmem:[%s168] sm:$0xff]
        %v170 = vld [vmem:[%s168 + $0x8] sm:$0xf]
        %v171 = vld [vmem:[%s0] sm:$0xff]
        %s172 = scalar_lea.vmem %s0, 8
        %v173 = vld [vmem:[%s172] sm:$0xff]
        %176 = vst [vmem:[#allocation1] ss:$2 sm:$0xff] %v169
        %s177 = scalar_lea.vmem [#allocation1], 16
        %178 = vst [vmem:[%s177] ss:$2 sm:$0xff] %v170
        %v179 = vld.sshfl [vmem:[#allocation1] sm:$0xff pattern:$0x75316420]
        %v180 = vld.sshfl [vmem:[#allocation1 + $0x8] sm:$0xff pattern:$0x75316420]
        %v181 = vld.sshfl [vmem:[#allocation1 + $0x10] sm:$0xff pattern:$0x75316420]
        %182 = vrot.lane.b32.xlu0 %v179, 126
        %v183 = vpop.permute.xlu0 %182
        %184 = vrot.lane.b32.xlu0 %v180, 126
        %v185 = vpop.permute.xlu0 %184
        %186 = vrot.lane.b32.xlu0 %v181, 126
        %v187 = vpop.permute.xlu0 %186
        %vm188 = vcmask 1031168
        %v189 = vsel %vm188, %v183, %v185
        %v190 = vsel %vm188, %v185, %v187
        %vm191 = vcmask 31744
        %v193 = vsel %vm191, %v173, 0
        %vm195 = vcmask 1043456
        %v196 = vsel %vm195, %v189, 0
        %v198 = vsel %vm195, %v190, 0
        %200 = vmatpush.msra.mxu0 0.0
        %201 = vmatpush.msra.mxu0 0.0
        %202 = vmatpush.msra.mxu0 0.0
        %203 = vmatpush.msra.mxu0 0.0
        %204 = vmatpush.msra.mxu0 0.0
        %205 = vmatpush.msra.mxu0 0.0
        %206 = vmatpush.msra.mxu0 0.0
        %207 = vmatpush.msra.mxu0 0.0
        %208 = vmatpush.msra.mxu0 0.0
        %209 = vmatpush.msra.mxu0 0.0
        %210 = vmatpush.msra.mxu0 0.0
        %211 = vmatpush.msra.mxu0 0.0
        %212 = vmatpush.msra.mxu0 0.0
        %213 = vmatpush.msra.mxu0 0.0
        %214 = vmatpush.msra.mxu0 0.0
        %215 = vmatpush.msra.mxu0 %v196
        %216 = vmatmul.f32.gmra.mxu0 %v193
        %v217 = vpop.f32.mrf.mxu0
        %v218 = vadd.f32 0.0, %v217
        %219 = vdwg.mxu0
        %220 = vmatpush.msra.mxu0 0.0
        %221 = vmatpush.msra.mxu0 0.0
        %222 = vmatpush.msra.mxu0 0.0
        %223 = vmatpush.msra.mxu0 0.0
        %224 = vmatpush.msra.mxu0 0.0
        %225 = vmatpush.msra.mxu0 0.0
        %226 = vmatpush.msra.mxu0 0.0
        %227 = vmatpush.msra.mxu0 0.0
        %228 = vmatpush.msra.mxu0 0.0
        %229 = vmatpush.msra.mxu0 0.0
        %230 = vmatpush.msra.mxu0 0.0
        %231 = vmatpush.msra.mxu0 0.0
        %232 = vmatpush.msra.mxu0 0.0
        %233 = vmatpush.msra.mxu0 0.0
        %234 = vmatpush.msra.mxu0 0.0
        %235 = vmatpush.msra.mxu0 %v198
        %236 = vmatmul.f32.gmra.mxu0 %v193
        %v237 = vpop.f32.mrf.mxu0
        %v238 = vadd.f32 0.0, %v237
        %239 = vdwg.mxu0
        %240 = vst [vmem:[#allocation1] ss:$2 sm:$0xff] %v169
        %v241 = vld.sshfl [vmem:[#allocation1] sm:$0xff pattern:$0x75316420]
        %v242 = vld.sshfl [vmem:[#allocation1 + $0x8] sm:$0xff pattern:$0x75316420]
        %v244 = vsel %vm191, %v171, 0
        %v246 = vsel %vm195, %v241, 0
        %v248 = vsel %vm195, %v242, 0
        %250 = vmatpush.msra.mxu0 0.0
        %251 = vmatpush.msra.mxu0 0.0
        %252 = vmatpush.msra.mxu0 0.0
        %253 = vmatpush.msra.mxu0 0.0
        %254 = vmatpush.msra.mxu0 0.0
        %255 = vmatpush.msra.mxu0 0.0
        %256 = vmatpush.msra.mxu0 0.0
        %257 = vmatpush.msra.mxu0 0.0
        %258 = vmatpush.msra.mxu0 0.0
        %259 = vmatpush.msra.mxu0 0.0
        %260 = vmatpush.msra.mxu0 0.0
        %261 = vmatpush.msra.mxu0 0.0
        %262 = vmatpush.msra.mxu0 0.0
        %263 = vmatpush.msra.mxu0 0.0
        %264 = vmatpush.msra.mxu0 0.0
        %265 = vmatpush.msra.mxu0 %v246
        %266 = vmatmul.f32.gmra.mxu0 %v244
        %v267 = vpop.f32.mrf.mxu0
        %v268 = vadd.f32 %v218, %v267
        %269 = vdwg.mxu0
        %270 = vmatpush.msra.mxu0 0.0
        %271 = vmatpush.msra.mxu0 0.0
        %272 = vmatpush.msra.mxu0 0.0
        %273 = vmatpush.msra.mxu0 0.0
        %274 = vmatpush.msra.mxu0 0.0
        %275 = vmatpush.msra.mxu0 0.0
        %276 = vmatpush.msra.mxu0 0.0
        %277 = vmatpush.msra.mxu0 0.0
        %278 = vmatpush.msra.mxu0 0.0
        %279 = vmatpush.msra.mxu0 0.0
        %280 = vmatpush.msra.mxu0 0.0
        %281 = vmatpush.msra.mxu0 0.0
        %282 = vmatpush.msra.mxu0 0.0
        %283 = vmatpush.msra.mxu0 0.0
        %284 = vmatpush.msra.mxu0 0.0
        %285 = vmatpush.msra.mxu0 %v248
        %286 = vmatmul.f32.gmra.mxu0 %v244
        %v287 = vpop.f32.mrf.mxu0
        %v288 = vadd.f32 %v238, %v287
        %289 = vdwg.mxu0
        %s290 = scalar_lea.vmem %s0, 16
        %v291 = vld [vmem:[%s290] sm:$0xff]
        %292 = vst [vmem:[#allocation1] ss:$2 sm:$0xff] %v169
        %s293 = scalar_lea.vmem [#allocation1], 16
        %294 = vst [vmem:[%s293] ss:$2 sm:$0xff] %v170
        %v295 = vld.sshfl [vmem:[#allocation1] sm:$0xff pattern:$0x75316420]
        %v296 = vld.sshfl [vmem:[#allocation1 + $0x8] sm:$0xff pattern:$0x75316420]
        %v297 = vld.sshfl [vmem:[#allocation1 + $0x10] sm:$0xff pattern:$0x75316420]
        %298 = vrot.lane.b32.xlu0 %v295, 124
        %v299 = vpop.permute.xlu0 %298
        %300 = vrot.lane.b32.xlu0 %v296, 124
        %v301 = vpop.permute.xlu0 %300
        %302 = vrot.lane.b32.xlu0 %v297, 124
        %v303 = vpop.permute.xlu0 %302
        %vm304 = vcmask 1014784
        %v305 = vsel %vm304, %v299, %v301
        %v306 = vsel %vm304, %v301, %v303
        %v308 = vsel %vm191, %v291, 0
        %v310 = vsel %vm195, %v305, 0
        %v312 = vsel %vm195, %v306, 0
        %314 = vmatpush.msra.mxu0 0.0
        %315 = vmatpush.msra.mxu0 0.0
        %316 = vmatpush.msra.mxu0 0.0
        %317 = vmatpush.msra.mxu0 0.0
        %318 = vmatpush.msra.mxu0 0.0
        %319 = vmatpush.msra.mxu0 0.0
        %320 = vmatpush.msra.mxu0 0.0
        %321 = vmatpush.msra.mxu0 0.0
        %322 = vmatpush.msra.mxu0 0.0
        %323 = vmatpush.msra.mxu0 0.0
        %324 = vmatpush.msra.mxu0 0.0
        %325 = vmatpush.msra.mxu0 0.0
        %326 = vmatpush.msra.mxu0 0.0
        %327 = vmatpush.msra.mxu0 0.0
        %328 = vmatpush.msra.mxu0 0.0
        %329 = vmatpush.msra.mxu0 %v310
        %330 = vmatmul.f32.gmra.mxu0 %v308
        %v331 = vpop.f32.mrf.mxu0
        %v332 = vadd.f32 0.0, %v331
        %333 = vdwg.mxu0
        %334 = vmatpush.msra.mxu0 0.0
        %335 = vmatpush.msra.mxu0 0.0
        %336 = vmatpush.msra.mxu0 0.0
        %337 = vmatpush.msra.mxu0 0.0
        %338 = vmatpush.msra.mxu0 0.0
        %339 = vmatpush.msra.mxu0 0.0
        %340 = vmatpush.msra.mxu0 0.0
        %341 = vmatpush.msra.mxu0 0.0
        %342 = vmatpush.msra.mxu0 0.0
        %343 = vmatpush.msra.mxu0 0.0
        %344 = vmatpush.msra.mxu0 0.0
        %345 = vmatpush.msra.mxu0 0.0
        %346 = vmatpush.msra.mxu0 0.0
        %347 = vmatpush.msra.mxu0 0.0
        %348 = vmatpush.msra.mxu0 0.0
        %349 = vmatpush.msra.mxu0 %v312
        %350 = vmatmul.f32.gmra.mxu0 %v308
        %v351 = vpop.f32.mrf.mxu0
        %v352 = vadd.f32 0.0, %v351
        %353 = vdwg.mxu0
        %v354 = vadd.f32 %v268, %v332
        %v355 = vadd.f32 %v288, %v352
        %s356 = scalar_lea.vmem %s0, 24
        %v357 = vld [vmem:[%s356] sm:$0xff]
        %358 = vst [vmem:[#allocation1] ss:$2 sm:$0xff] %v169
        %s359 = scalar_lea.vmem [#allocation1], 16
        %360 = vst [vmem:[%s359] ss:$2 sm:$0xff] %v170
        %v361 = vld.sshfl [vmem:[#allocation1] sm:$0xff pattern:$0x75316420]
        %v362 = vld.sshfl [vmem:[#allocation1 + $0x8] sm:$0xff pattern:$0x75316420]
        %v363 = vld.sshfl [vmem:[#allocation1 + $0x10] sm:$0xff pattern:$0x75316420]
        %364 = vrot.lane.b32.xlu0 %v361, 96
        %v365 = vpop.permute.xlu0 %364
        %366 = vrot.lane.b32.xlu0 %v362, 96
        %v367 = vpop.permute.xlu0 %366
        %368 = vrot.lane.b32.xlu0 %v363, 96
        %v369 = vpop.permute.xlu0 %368
        %vm370 = vcmask 785408
        %v371 = vsel %vm370, %v365, %v367
        %v372 = vsel %vm370, %v367, %v369
        %v374 = vsel %vm191, %v357, 0
        %v376 = vsel %vm195, %v371, 0
        %v378 = vsel %vm195, %v372, 0
        %380 = vmatpush.msra.mxu0 0.0
        %381 = vmatpush.msra.mxu0 0.0
        %382 = vmatpush.msra.mxu0 0.0
        %383 = vmatpush.msra.mxu0 0.0
        %384 = vmatpush.msra.mxu0 0.0
        %385 = vmatpush.msra.mxu0 0.0
        %386 = vmatpush.msra.mxu0 0.0
        %387 = vmatpush.msra.mxu0 0.0
        %388 = vmatpush.msra.mxu0 0.0
        %389 = vmatpush.msra.mxu0 0.0
        %390 = vmatpush.msra.mxu0 0.0
        %391 = vmatpush.msra.mxu0 0.0
        %392 = vmatpush.msra.mxu0 0.0
        %393 = vmatpush.msra.mxu0 0.0
        %394 = vmatpush.msra.mxu0 0.0
        %395 = vmatpush.msra.mxu0 %v376
        %396 = vmatmul.f32.gmra.mxu0 %v374
        %v397 = vpop.f32.mrf.mxu0
        %v398 = vadd.f32 0.0, %v397
        %399 = vdwg.mxu0
        %400 = vmatpush.msra.mxu0 0.0
        %401 = vmatpush.msra.mxu0 0.0
        %402 = vmatpush.msra.mxu0 0.0
        %403 = vmatpush.msra.mxu0 0.0
        %404 = vmatpush.msra.mxu0 0.0
        %405 = vmatpush.msra.mxu0 0.0
        %406 = vmatpush.msra.mxu0 0.0
        %407 = vmatpush.msra.mxu0 0.0
        %408 = vmatpush.msra.mxu0 0.0
        %409 = vmatpush.msra.mxu0 0.0
        %410 = vmatpush.msra.mxu0 0.0
        %411 = vmatpush.msra.mxu0 0.0
        %412 = vmatpush.msra.mxu0 0.0
        %413 = vmatpush.msra.mxu0 0.0
        %414 = vmatpush.msra.mxu0 0.0
        %415 = vmatpush.msra.mxu0 %v378
        %416 = vmatmul.f32.gmra.mxu0 %v374
        %v417 = vpop.f32.mrf.mxu0
        %v418 = vadd.f32 0.0, %v417
        %419 = vdwg.mxu0
        %v420 = vadd.f32 %v354, %v398
        %v421 = vadd.f32 %v355, %v418
        %s422 = scalar_lea.vmem %s0, 32
        %v423 = vld [vmem:[%s422] sm:$0xff]
        %424 = vst [vmem:[#allocation1] ss:$2 sm:$0xff] %v169
        %s425 = scalar_lea.vmem [#allocation1], 16
        %426 = vst [vmem:[%s425] ss:$2 sm:$0xff] %v170
        %v427 = vld.sshfl [vmem:[#allocation1] sm:$0xff pattern:$0x75316420]
        %v428 = vld.sshfl [vmem:[#allocation1 + $0x8] sm:$0xff pattern:$0x75316420]
        %v429 = vld.sshfl [vmem:[#allocation1 + $0x10] sm:$0xff pattern:$0x75316420]
        %430 = vrot.lane.b32.xlu0 %v427, 94
        %v431 = vpop.permute.xlu0 %430
        %432 = vrot.lane.b32.xlu0 %v428, 94
        %v433 = vpop.permute.xlu0 %432
        %434 = vrot.lane.b32.xlu0 %v429, 94
        %v435 = vpop.permute.xlu0 %434
        %vm436 = vcmask 769024
        %v437 = vsel %vm436, %v431, %v433
        %v438 = vsel %vm436, %v433, %v435
        %v440 = vsel %vm191, %v423, 0
        %v442 = vsel %vm195, %v437, 0
        %v444 = vsel %vm195, %v438, 0
        %446 = vmatpush.msra.mxu0 0.0
        %447 = vmatpush.msra.mxu0 0.0
        %448 = vmatpush.msra.mxu0 0.0
        %449 = vmatpush.msra.mxu0 0.0
        %450 = vmatpush.msra.mxu0 0.0
        %451 = vmatpush.msra.mxu0 0.0
        %452 = vmatpush.msra.mxu0 0.0
        %453 = vmatpush.msra.mxu0 0.0
        %454 = vmatpush.msra.mxu0 0.0
        %455 = vmatpush.msra.mxu0 0.0
        %456 = vmatpush.msra.mxu0 0.0
        %457 = vmatpush.msra.mxu0 0.0
        %458 = vmatpush.msra.mxu0 0.0
        %459 = vmatpush.msra.mxu0 0.0
        %460 = vmatpush.msra.mxu0 0.0
        %461 = vmatpush.msra.mxu0 %v442
        %462 = vmatmul.f32.gmra.mxu0 %v440
        %v463 = vpop.f32.mrf.mxu0
        %v464 = vadd.f32 0.0, %v463
        %465 = vdwg.mxu0
        %466 = vmatpush.msra.mxu0 0.0
        %467 = vmatpush.msra.mxu0 0.0
        %468 = vmatpush.msra.mxu0 0.0
        %469 = vmatpush.msra.mxu0 0.0
        %470 = vmatpush.msra.mxu0 0.0
        %471 = vmatpush.msra.mxu0 0.0
        %472 = vmatpush.msra.mxu0 0.0
        %473 = vmatpush.msra.mxu0 0.0
        %474 = vmatpush.msra.mxu0 0.0
        %475 = vmatpush.msra.mxu0 0.0
        %476 = vmatpush.msra.mxu0 0.0
        %477 = vmatpush.msra.mxu0 0.0
        %478 = vmatpush.msra.mxu0 0.0
        %479 = vmatpush.msra.mxu0 0.0
        %480 = vmatpush.msra.mxu0 0.0
        %481 = vmatpush.msra.mxu0 %v444
        %482 = vmatmul.f32.gmra.mxu0 %v440
        %v483 = vpop.f32.mrf.mxu0
        %v484 = vadd.f32 0.0, %v483
        %485 = vdwg.mxu0
        %v486 = vadd.f32 %v420, %v464
        %v487 = vadd.f32 %v421, %v484
        %s488 = scalar_lea.vmem %s0, 40
        %v489 = vld [vmem:[%s488] sm:$0xff]
        %490 = vst [vmem:[#allocation1] ss:$2 sm:$0xff] %v169
        %s491 = scalar_lea.vmem [#allocation1], 16
        %492 = vst [vmem:[%s491] ss:$2 sm:$0xff] %v170
        %v493 = vld.sshfl [vmem:[#allocation1] sm:$0xff pattern:$0x75316420]
        %v494 = vld.sshfl [vmem:[#allocation1 + $0x8] sm:$0xff pattern:$0x75316420]
        %v495 = vld.sshfl [vmem:[#allocation1 + $0x10] sm:$0xff pattern:$0x75316420]
        %496 = vrot.lane.b32.xlu0 %v493, 92
        %v497 = vpop.permute.xlu0 %496
        %498 = vrot.lane.b32.xlu0 %v494, 92
        %v499 = vpop.permute.xlu0 %498
        %500 = vrot.lane.b32.xlu0 %v495, 92
        %v501 = vpop.permute.xlu0 %500
        %vm502 = vcmask 752640
        %v503 = vsel %vm502, %v497, %v499
        %v504 = vsel %vm502, %v499, %v501
        %v506 = vsel %vm191, %v489, 0
        %v508 = vsel %vm195, %v503, 0
        %v510 = vsel %vm195, %v504, 0
        %512 = vmatpush.msra.mxu0 0.0
        %513 = vmatpush.msra.mxu0 0.0
        %514 = vmatpush.msra.mxu0 0.0
        %515 = vmatpush.msra.mxu0 0.0
        %516 = vmatpush.msra.mxu0 0.0
        %517 = vmatpush.msra.mxu0 0.0
        %518 = vmatpush.msra.mxu0 0.0
        %519 = vmatpush.msra.mxu0 0.0
        %520 = vmatpush.msra.mxu0 0.0
        %521 = vmatpush.msra.mxu0 0.0
        %522 = vmatpush.msra.mxu0 0.0
        %523 = vmatpush.msra.mxu0 0.0
        %524 = vmatpush.msra.mxu0 0.0
        %525 = vmatpush.msra.mxu0 0.0
        %526 = vmatpush.msra.mxu0 0.0
        %527 = vmatpush.msra.mxu0 %v508
        %528 = vmatmul.f32.gmra.mxu0 %v506
        %v529 = vpop.f32.mrf.mxu0
        %v530 = vadd.f32 0.0, %v529
        %531 = vdwg.mxu0
        %532 = vmatpush.msra.mxu0 0.0
        %533 = vmatpush.msra.mxu0 0.0
        %534 = vmatpush.msra.mxu0 0.0
        %535 = vmatpush.msra.mxu0 0.0
        %536 = vmatpush.msra.mxu0 0.0
        %537 = vmatpush.msra.mxu0 0.0
        %538 = vmatpush.msra.mxu0 0.0
        %539 = vmatpush.msra.mxu0 0.0
        %540 = vmatpush.msra.mxu0 0.0
        %541 = vmatpush.msra.mxu0 0.0
        %542 = vmatpush.msra.mxu0 0.0
        %543 = vmatpush.msra.mxu0 0.0
        %544 = vmatpush.msra.mxu0 0.0
        %545 = vmatpush.msra.mxu0 0.0
        %546 = vmatpush.msra.mxu0 0.0
        %547 = vmatpush.msra.mxu0 %v510
        %548 = vmatmul.f32.gmra.mxu0 %v506
        %v549 = vpop.f32.mrf.mxu0
        %v550 = vadd.f32 0.0, %v549
        %551 = vdwg.mxu0
        %v552 = vadd.f32 %v486, %v530
        %v553 = vadd.f32 %v487, %v550
        %s554 = scalar_lea.vmem %s0, 48
        %v555 = vld [vmem:[%s554] sm:$0xff]
        %556 = vst [vmem:[#allocation1] ss:$2 sm:$0xff] %v169
        %s557 = scalar_lea.vmem [#allocation1], 16
        %558 = vst [vmem:[%s557] ss:$2 sm:$0xff] %v170
        %v559 = vld.sshfl [vmem:[#allocation1] sm:$0xff pattern:$0x75316420]
        %v560 = vld.sshfl [vmem:[#allocation1 + $0x8] sm:$0xff pattern:$0x75316420]
        %v561 = vld.sshfl [vmem:[#allocation1 + $0x10] sm:$0xff pattern:$0x75316420]
        %562 = vrot.lane.b32.xlu0 %v559, 64
        %v563 = vpop.permute.xlu0 %562
        %564 = vrot.lane.b32.xlu0 %v560, 64
        %v565 = vpop.permute.xlu0 %564
        %566 = vrot.lane.b32.xlu0 %v561, 64
        %v567 = vpop.permute.xlu0 %566
        %vm568 = vcmask 523264
        %v569 = vsel %vm568, %v563, %v565
        %v570 = vsel %vm568, %v565, %v567
        %v572 = vsel %vm191, %v555, 0
        %v574 = vsel %vm195, %v569, 0
        %v576 = vsel %vm195, %v570, 0
        %578 = vmatpush.msra.mxu0 0.0
        %579 = vmatpush.msra.mxu0 0.0
        %580 = vmatpush.msra.mxu0 0.0
        %581 = vmatpush.msra.mxu0 0.0
        %582 = vmatpush.msra.mxu0 0.0
        %583 = vmatpush.msra.mxu0 0.0
        %584 = vmatpush.msra.mxu0 0.0
        %585 = vmatpush.msra.mxu0 0.0
        %586 = vmatpush.msra.mxu0 0.0
        %587 = vmatpush.msra.mxu0 0.0
        %588 = vmatpush.msra.mxu0 0.0
        %589 = vmatpush.msra.mxu0 0.0
        %590 = vmatpush.msra.mxu0 0.0
        %591 = vmatpush.msra.mxu0 0.0
        %592 = vmatpush.msra.mxu0 0.0
        %593 = vmatpush.msra.mxu0 %v574
        %594 = vmatmul.f32.gmra.mxu0 %v572
        %v595 = vpop.f32.mrf.mxu0
        %v596 = vadd.f32 0.0, %v595
        %597 = vdwg.mxu0
        %598 = vmatpush.msra.mxu0 0.0
        %599 = vmatpush.msra.mxu0 0.0
        %600 = vmatpush.msra.mxu0 0.0
        %601 = vmatpush.msra.mxu0 0.0
        %602 = vmatpush.msra.mxu0 0.0
        %603 = vmatpush.msra.mxu0 0.0
        %604 = vmatpush.msra.mxu0 0.0
        %605 = vmatpush.msra.mxu0 0.0
        %606 = vmatpush.msra.mxu0 0.0
        %607 = vmatpush.msra.mxu0 0.0
        %608 = vmatpush.msra.mxu0 0.0
        %609 = vmatpush.msra.mxu0 0.0
        %610 = vmatpush.msra.mxu0 0.0
        %611 = vmatpush.msra.mxu0 0.0
        %612 = vmatpush.msra.mxu0 0.0
        %613 = vmatpush.msra.mxu0 %v576
        %614 = vmatmul.f32.gmra.mxu0 %v572
        %v615 = vpop.f32.mrf.mxu0
        %v616 = vadd.f32 0.0, %v615
        %617 = vdwg.mxu0
        %v618 = vadd.f32 %v552, %v596
        %v619 = vadd.f32 %v553, %v616
        %s620 = scalar_lea.vmem %s0, 56
        %v621 = vld [vmem:[%s620] sm:$0xff]
        %622 = vst [vmem:[#allocation1] ss:$2 sm:$0xff] %v169
        %s623 = scalar_lea.vmem [#allocation1], 16
        %624 = vst [vmem:[%s623] ss:$2 sm:$0xff] %v170
        %v625 = vld.sshfl [vmem:[#allocation1] sm:$0xff pattern:$0x75316420]
        %v626 = vld.sshfl [vmem:[#allocation1 + $0x8] sm:$0xff pattern:$0x75316420]
        %v627 = vld.sshfl [vmem:[#allocation1 + $0x10] sm:$0xff pattern:$0x75316420]
        %628 = vrot.lane.b32.xlu0 %v625, 62
        %v629 = vpop.permute.xlu0 %628
        %630 = vrot.lane.b32.xlu0 %v626, 62
        %v631 = vpop.permute.xlu0 %630
        %632 = vrot.lane.b32.xlu0 %v627, 62
        %v633 = vpop.permute.xlu0 %632
        %vm634 = vcmask 506880
        %v635 = vsel %vm634, %v629, %v631
        %v636 = vsel %vm634, %v631, %v633
        %v638 = vsel %vm191, %v621, 0
        %v640 = vsel %vm195, %v635, 0
        %v642 = vsel %vm195, %v636, 0
        %644 = vmatpush.msra.mxu0 0.0
        %645 = vmatpush.msra.mxu0 0.0
        %646 = vmatpush.msra.mxu0 0.0
        %647 = vmatpush.msra.mxu0 0.0
        %648 = vmatpush.msra.mxu0 0.0
        %649 = vmatpush.msra.mxu0 0.0
        %650 = vmatpush.msra.mxu0 0.0
        %651 = vmatpush.msra.mxu0 0.0
        %652 = vmatpush.msra.mxu0 0.0
        %653 = vmatpush.msra.mxu0 0.0
        %654 = vmatpush.msra.mxu0 0.0
        %655 = vmatpush.msra.mxu0 0.0
        %656 = vmatpush.msra.mxu0 0.0
        %657 = vmatpush.msra.mxu0 0.0
        %658 = vmatpush.msra.mxu0 0.0
        %659 = vmatpush.msra.mxu0 %v640
        %660 = vmatmul.f32.gmra.mxu0 %v638
        %v661 = vpop.f32.mrf.mxu0
        %v662 = vadd.f32 0.0, %v661
        %663 = vdwg.mxu0
        %664 = vmatpush.msra.mxu0 0.0
        %665 = vmatpush.msra.mxu0 0.0
        %666 = vmatpush.msra.mxu0 0.0
        %667 = vmatpush.msra.mxu0 0.0
        %668 = vmatpush.msra.mxu0 0.0
        %669 = vmatpush.msra.mxu0 0.0
        %670 = vmatpush.msra.mxu0 0.0
        %671 = vmatpush.msra.mxu0 0.0
        %672 = vmatpush.msra.mxu0 0.0
        %673 = vmatpush.msra.mxu0 0.0
        %674 = vmatpush.msra.mxu0 0.0
        %675 = vmatpush.msra.mxu0 0.0
        %676 = vmatpush.msra.mxu0 0.0
        %677 = vmatpush.msra.mxu0 0.0
        %678 = vmatpush.msra.mxu0 0.0
        %679 = vmatpush.msra.mxu0 %v642
        %680 = vmatmul.f32.gmra.mxu0 %v638
        %v681 = vpop.f32.mrf.mxu0
        %v682 = vadd.f32 0.0, %v681
        %683 = vdwg.mxu0
        %v684 = vadd.f32 %v618, %v662
        %v685 = vadd.f32 %v619, %v682
        %s686 = scalar_lea.vmem %s0, 64
        %v687 = vld [vmem:[%s686] sm:$0xff]
        %688 = vst [vmem:[#allocation1] ss:$2 sm:$0xff] %v169
        %s689 = scalar_lea.vmem [#allocation1], 16
        %690 = vst [vmem:[%s689] ss:$2 sm:$0xff] %v170
        %v691 = vld.sshfl [vmem:[#allocation1] sm:$0xff pattern:$0x75316420]
        %v692 = vld.sshfl [vmem:[#allocation1 + $0x8] sm:$0xff pattern:$0x75316420]
        %v693 = vld.sshfl [vmem:[#allocation1 + $0x10] sm:$0xff pattern:$0x75316420]
        %694 = vrot.lane.b32.xlu0 %v691, 60
        %v695 = vpop.permute.xlu0 %694
        %696 = vrot.lane.b32.xlu0 %v692, 60
        %v697 = vpop.permute.xlu0 %696
        %698 = vrot.lane.b32.xlu0 %v693, 60
        %v699 = vpop.permute.xlu0 %698
        %vm700 = vcmask 490496
        %v701 = vsel %vm700, %v695, %v697
        %v702 = vsel %vm700, %v697, %v699
        %v704 = vsel %vm191, %v687, 0
        %v706 = vsel %vm195, %v701, 0
        %v708 = vsel %vm195, %v702, 0
        %710 = vmatpush.msra.mxu0 0.0
        %711 = vmatpush.msra.mxu0 0.0
        %712 = vmatpush.msra.mxu0 0.0
        %713 = vmatpush.msra.mxu0 0.0
        %714 = vmatpush.msra.mxu0 0.0
        %715 = vmatpush.msra.mxu0 0.0
        %716 = vmatpush.msra.mxu0 0.0
        %717 = vmatpush.msra.mxu0 0.0
        %718 = vmatpush.msra.mxu0 0.0
        %719 = vmatpush.msra.mxu0 0.0
        %720 = vmatpush.msra.mxu0 0.0
        %721 = vmatpush.msra.mxu0 0.0
        %722 = vmatpush.msra.mxu0 0.0
        %723 = vmatpush.msra.mxu0 0.0
        %724 = vmatpush.msra.mxu0 0.0
        %725 = vmatpush.msra.mxu0 %v706
        %726 = vmatmul.f32.gmra.mxu0 %v704
        %v727 = vpop.f32.mrf.mxu0
        %v728 = vadd.f32 0.0, %v727
        %729 = vdwg.mxu0
        %730 = vmatpush.msra.mxu0 0.0
        %731 = vmatpush.msra.mxu0 0.0
        %732 = vmatpush.msra.mxu0 0.0
        %733 = vmatpush.msra.mxu0 0.0
        %734 = vmatpush.msra.mxu0 0.0
        %735 = vmatpush.msra.mxu0 0.0
        %736 = vmatpush.msra.mxu0 0.0
        %737 = vmatpush.msra.mxu0 0.0
        %738 = vmatpush.msra.mxu0 0.0
        %739 = vmatpush.msra.mxu0 0.0
        %740 = vmatpush.msra.mxu0 0.0
        %741 = vmatpush.msra.mxu0 0.0
        %742 = vmatpush.msra.mxu0 0.0
        %743 = vmatpush.msra.mxu0 0.0
        %744 = vmatpush.msra.mxu0 0.0
        %745 = vmatpush.msra.mxu0 %v708
        %746 = vmatmul.f32.gmra.mxu0 %v704
        %v747 = vpop.f32.mrf.mxu0
        %v748 = vadd.f32 0.0, %v747
        %749 = vdwg.mxu0
        %v750 = vadd.f32 %v684, %v728
        %v751 = vadd.f32 %v685, %v748
        %v752 = vld [vmem:[%s1] sm:$0xff]
        %754 = vset.pattern.permute.xlu0 0
        %755 = vperm.xlu0 %754, %v752
        %v756 = vpop.permute.xlu0 %755
        %v758 = vadd.f32 %v750, %v756
        %v759 = vadd.f32 %v751, %v756
        %v760 = vmul.f32 %v758, 0.01
        %v761 = vmul.f32 %v759, 0.01
        %v762 = vmax.f32 %v758, %v760
        %v763 = vmax.f32 %v759, %v761
        %764 = vst [vmem:[%s163] sm:$0xff] %v762
        %765 = vst [vmem:[%s163 + $0x8] sm:$0xff] %v763
        %s766 = sand.u32 %s93, 1
        %s767 = scalar_lea.sflag [#allocation3], %s766
        %s768 = sand.u32 %s93, 1
        %s769 = smul.addr %s768, 16
        %s770 = scalar_lea.vmem [#allocation2], %s769
        // Predicated region
        $region33: #{tpu_custom_call.1} parent=31 // pred_check
          %p771 = pneg %p103
        $region34: #{tpu_custom_call.1} parent=31 // pred_check_branch
          %773 = sbr.rel (%p771) target = $region36
        $region35: #{tpu_custom_call.1} parent=31 // pred_region
          %775 = vsyncadd %s767, 0
          %s776 = smul.addr %s17, 2
          %s777 = smul.addr %s776, 8
          %s778 = scalar_lea.hbm %s3, %s777
          %s780 = sshll.u32 %s770, 4
          %s781 = int_to_ptr.vmem [resolvable:$true] %s780
          %s782 = sshll.u32 %s778, 4
          %s783 = int_to_ptr.hbm [resolvable:$true] %s782
          %785 = dma.vmem_to_hbm [thread:$0]  %s781, 256, %s783, %s767
        $region36: #{tpu_custom_call.1} parent=31 // pred_fallthru
          _
      $region32: #{tpu_custom_call.1} parent=5 // pred_fallthru
        _
      %p786 = scmp.le.s32.totalorder 2, %s12
      // Predicated region
      $region37: #{tpu_custom_call.1} parent=5 // pred_check
        %p787 = pneg %p786
      $region38: #{tpu_custom_call.1} parent=5 // pred_check_branch
        %789 = sbr.rel (%p787) target = $region40
      $region39: #{tpu_custom_call.1} parent=5 // pred_region
        %s790 = ssub.s32 %s12, 2
        // Predicated region
        $region41: #{tpu_custom_call.1} parent=39 // pred_check
          %p791 = pneg %p109
        $region42: #{tpu_custom_call.1} parent=39 // pred_check_branch
          %793 = sbr.rel (%p791) target = $region44
        $region43: #{tpu_custom_call.1} parent=39 // pred_region
          %s794 = sand.u32 %s94, 1
          %s795 = scalar_lea.sflag [#allocation3], %s794
          %s796 = sand.u32 %s94, 1
          %s797 = smul.addr %s796, 16
          %s798 = scalar_lea.vmem [#allocation2], %s797
          %800 = dma.done %s795, 256
        $region44: #{tpu_custom_call.1} parent=39 // pred_fallthru
          _
      $region40: #{tpu_custom_call.1} parent=5 // pred_fallthru
        _
    $region6: #{tpu_custom_call.1} parent=1 // loop_footer
      %s16 = sadd.s32 1, %s12
    $region7: #{tpu_custom_call.1} parent=1 // loop_footer_branch
      %11 = sbr.rel target = $region3
    $region8: #{tpu_custom_call.1} parent=1 // loop_exit
      _
    %801 = vsyncpa [#allocation3], 1
    %s802 = scalar_lea.sflag [#allocation3], 1
    %803 = vsyncpa %s802, 1

</llo_original>
